<compile_context>
chip_gen: v6e
topology: v6e:2x2x1
jax: 0.10.0
libtpu: 0.0.40
codegen_flags: <defaults>
</compile_context>

<pallas_src>
import jax
import jax.numpy as jnp
from jax.experimental import pallas as pl
from jax.experimental.pallas import tpu as pltpu

_EPS = 1e-7                    # safe_log eps
_MATMUL_DTYPE = jnp.float32    # optionally jnp.bfloat16 on v6e/v7x for ~3-6x
                               # MXU throughput (slightly changes loss value)
_FRAMES_DB_BUDGET = 12 * 2**20  # double-buffered frames-tile VMEM budget


def _round_up(x, m):
    return -(-x // m) * m


def _make_msfft_kernel(alpha, beta, tm, tk, n_pad):
    """Per-grid-step kernel: two DFT matmuls on stacked (ref,teacher,student)
    frame tiles, magnitude, hoisted logs, and accumulation of the four
    asymmetric-L1 sums into a lane-dense resident (1, 128) output block."""
    alpha = float(alpha)
    beta = float(beta)
    simple = (alpha >= 0.0) and (beta >= 0.0)

    def kernel(fr_ref, cos_ref, sin_ref, out_ref):
        first = (pl.program_id(0) == 0) & (pl.program_id(1) == 0)

        @pl.when(first)
        def _():
            out_ref[...] = jnp.zeros_like(out_ref)

        # (3, tm, n_pad) -> (3*tm, n_pad): one matmul per DFT basis for all
        # three signals (leading-dim merge, layout-free since tm % 8 == 0).
        frames = fr_ref[...].reshape(3 * tm, n_pad)
        re = jnp.dot(frames, cos_ref[...], preferred_element_type=jnp.float32)
        im = jnp.dot(frames, sin_ref[...], preferred_element_type=jnp.float32)
        mag = jnp.sqrt(re * re + im * im)          # (3*tm, tk)
        logm = jnp.log(mag + _EPS)                 # logs computed once, reused

        m = mag.reshape(3, tm, tk)
        lg = logm.reshape(3, tm, tk)
        m_r, m_t, m_s = m[0], m[1], m[2]
        l_r, l_t, l_s = lg[0], lg[1], lg[2]

        def asim_sum(a, b):
            d = a - b
            if simple:
                # |alpha*pos + beta*neg| == where(d>0, alpha*d, -beta*d)
                # for alpha, beta >= 0 (one VPU pass fewer than abs(where)).
                w = jnp.where(d > 0, alpha * d, -beta * d)
            else:
                w = jnp.abs(jnp.where(d > 0, alpha * d, beta * d))
            return jnp.sum(w, keepdims=True)       # (1, 1)

        lin_rs = asim_sum(m_r, m_s)
        log_rs = asim_sum(l_r, l_s)
        lin_ts = asim_sum(m_t, m_s)
        log_ts = asim_sum(l_t, l_s)

        # Pack the four partial sums into lanes 0..3 of the resident output.
        lane = jax.lax.broadcasted_iota(jnp.int32, (1, 128), 1)
        upd = (jnp.where(lane == 0, lin_rs, 0.0)
               + jnp.where(lane == 1, log_rs, 0.0)
               + jnp.where(lane == 2, lin_ts, 0.0)
               + jnp.where(lane == 3, log_ts, 0.0))
        out_ref[...] += upd

    return kernel


def _frames(x, n_fft, hop):
    """Reflect-pad (torch.stft center=True) and frame: (B, T) -> (B*F, n_fft)."""
    B, T = x.shape
    pad = n_fft // 2
    xp = jnp.pad(x, ((0, 0), (pad, pad)), mode="reflect")
    Lp = T + 2 * pad
    F = 1 + (Lp - n_fft) // hop
    idx = hop * jnp.arange(F)[:, None] + jnp.arange(n_fft)[None, :]
    # TODO(synk): the overlapped framing is still materialized in HBM by XLA
    # (~4x read inflation at overlap=0.75); an in-kernel framing from
    # pl.Element-offset signal chunks would remove it but is not done here.
    fr = xp[:, idx]                      # (B, F, n_fft)
    return fr.reshape(B * F, n_fft)


def _dft_basis(n_fft, k_pad):
    """Windowed (periodic Hann), 1/sqrt(n_fft)-normalized DFT basis matching
    torch.stft(..., hann_window(n_fft), onesided=True, normalized=True),
    zero-padded along the frequency axis to k_pad columns."""
    K = n_fft // 2 + 1
    n = jnp.arange(n_fft, dtype=jnp.float32)
    k = jnp.arange(K, dtype=jnp.float32)
    win = 0.5 * (1.0 - jnp.cos(2.0 * jnp.pi * n / n_fft))     # periodic hann
    ang = 2.0 * jnp.pi * n[:, None] * k[None, :] / n_fft
    norm = 1.0 / jnp.sqrt(jnp.float32(n_fft))                 # normalized=True
    cos_w = (win[:, None] * jnp.cos(ang)) * norm
    sin_w = (win[:, None] * jnp.sin(ang)) * norm
    if k_pad > K:
        z = ((0, 0), (0, k_pad - K))
        cos_w = jnp.pad(cos_w, z)
        sin_w = jnp.pad(sin_w, z)
    return cos_w.astype(jnp.float32), sin_w.astype(jnp.float32)


def _scale_losses(ref, teacher, student, n_fft, hop, alpha, beta):
    """Returns (ref-vs-student loss, teacher-vs-student loss) for one scale."""
    K = n_fft // 2 + 1

    fr = _frames(ref, n_fft, hop)
    ft = _frames(teacher, n_fft, hop)
    fs = _frames(student, n_fft, hop)
    M = fr.shape[0]

    # Lane-dense contraction dim (only pads the toy scales < 128).
    n_pad = _round_up(n_fft, 128)

    # Frequency tiling: K padded to a multiple of 128 (and of TK).
    k_pad = _round_up(K, 128)
    if k_pad <= 512:
        tk = k_pad
    else:
        tk = 256
        k_pad = _round_up(k_pad, tk)

    # Row tiling: multiple of 8, capped by a VMEM double-buffer budget.
    budget_rows = max(8, (_FRAMES_DB_BUDGET // (2 * 3 * n_pad * 4)) // 8 * 8)
    tm = min(256, budget_rows, _round_up(M, 8))
    m_pad = _round_up(M, tm)

    def prep(f):
        # Zero-padded rows / columns contribute exactly 0 to every sum.
        return jnp.pad(f, ((0, m_pad - M), (0, n_pad - n_fft)))

    frames3 = jnp.stack([prep(fr), prep(ft), prep(fs)], axis=0)  # (3,m_pad,n_pad)

    cos_w, sin_w = _dft_basis(n_fft, k_pad)
    if n_pad > n_fft:
        zr = ((0, n_pad - n_fft), (0, 0))
        cos_w = jnp.pad(cos_w, zr)
        sin_w = jnp.pad(sin_w, zr)

    if _MATMUL_DTYPE != jnp.float32:
        frames3 = frames3.astype(_MATMUL_DTYPE)
        cos_w = cos_w.astype(_MATMUL_DTYPE)
        sin_w = sin_w.astype(_MATMUL_DTYPE)

    num_m = m_pad // tm
    num_k = k_pad // tk

    # Choose loop order to minimize HBM re-fetch traffic: the operand whose
    # block index is constant along the inner axis is fetched only once.
    bpe = jnp.dtype(_MATMUL_DTYPE).itemsize
    frames_bytes = 3 * m_pad * n_pad * bpe
    basis_bytes = 2 * n_pad * k_pad * bpe
    k_inner = (frames_bytes + num_m * basis_bytes) <= (basis_bytes + num_k * frames_bytes)
    if k_inner:
        grid = (num_m, num_k)
        fr_map = lambda i, j: (0, i, 0)
        b_map = lambda i, j: (0, j)
    else:
        grid = (num_k, num_m)
        fr_map = lambda j, i: (0, i, 0)
        b_map = lambda j, i: (0, j)

    kernel = _make_msfft_kernel(alpha, beta, tm, tk, n_pad)

    out = pl.pallas_call(
        kernel,
        out_shape=jax.ShapeDtypeStruct((1, 128), jnp.float32),
        grid_spec=pltpu.PrefetchScalarGridSpec(
            num_scalar_prefetch=0,
            grid=grid,
            in_specs=[
                pl.BlockSpec((3, tm, n_pad), fr_map),
                pl.BlockSpec((n_pad, tk), b_map),
                pl.BlockSpec((n_pad, tk), b_map),
            ],
            out_specs=pl.BlockSpec((1, 128), lambda *_: (0, 0)),
        ),
        compiler_params=pltpu.CompilerParams(
            # Output block is a full reduction over both grid axes -> arbitrary.
            dimension_semantics=("arbitrary", "arbitrary"),
            vmem_limit_bytes=48 * 1024 * 1024,
        ),
    )(frames3, cos_w, sin_w)

    count = jnp.float32(M * K)          # unpadded (B, K, F) element count
    rs = (out[0, 0] + out[0, 1]) / count   # lin mean + log mean (ref vs stu)
    ts = (out[0, 2] + out[0, 3]) / count   # lin mean + log mean (tea vs stu)
    return rs, ts


def distillation_loss_forward(ref, teacher_synth, student_synth, scales, overlap,
                              log_vars, alpha=None, beta=None):
    """Mirrors distillation_loss.forward -> (loss, distillation_loss, loss0, loss1)."""
    if ref.ndim == 3:
        ref = jnp.squeeze(ref, -1)
    if teacher_synth.ndim == 3:
        teacher_synth = jnp.squeeze(teacher_synth, -1)
    if student_synth.ndim == 3:
        student_synth = jnp.squeeze(student_synth, -1)

    # alpha/beta == None -> ddsp_msfft_loss == asym loss with alpha = beta = 1.
    a = 1.0 if alpha is None else float(alpha)
    b = 1.0 if beta is None else float(beta)

    loss = jnp.float32(0.0)
    dloss = jnp.float32(0.0)
    for s in scales:
        hop = int(s * (1 - overlap))
        rs, ts = _scale_losses(ref, teacher_synth, student_synth, s, hop, a, b)
        loss = loss + rs
        dloss = dloss + ts

    precision0 = jnp.exp(-log_vars[0])
    loss0 = precision0 * loss + log_vars[0]
    precision1 = jnp.exp(-log_vars[1])
    loss1 = precision1 * dloss + log_vars[1]
    return loss, dloss, loss0, loss1


if __name__ == "__main__":
    key = jax.random.PRNGKey(0)
    k1, k2, k3 = jax.random.split(key, 3)
    B, T = 2, 256
    ref = jax.random.normal(k1, (B, T, 1), dtype=jnp.float32)
    teacher = jax.random.normal(k2, (B, T, 1), dtype=jnp.float32)
    student = jax.random.normal(k3, (B, T, 1), dtype=jnp.float32)

    scales = [64, 32]      # small stand-ins for the default [4096 .. 128]
    overlap = 0.75
    log_vars = jnp.zeros((2,), dtype=jnp.float32)   # nn.Parameter(torch.zeros(2))

    outs = distillation_loss_forward(ref, teacher, student, scales, overlap, log_vars)
    jax.block_until_ready(outs)
    print("KERNEL_OK")
</pallas_src>

<mosaic_0001>
module attributes {stable_mosaic.version = 11 : i64} {
  func.func @kernel(%arg0: i32, %arg1: i32, %arg2: memref<3x40x128xf32, #tpu.memory_space<vmem>>, %arg3: memref<128x128xf32, #tpu.memory_space<vmem>>, %arg4: memref<128x128xf32, #tpu.memory_space<vmem>>, %arg5: memref<1x128xf32, #tpu.memory_space<vmem>>) attributes {dimension_semantics = [#tpu.dimension_semantics<arbitrary>, #tpu.dimension_semantics<arbitrary>], iteration_bounds = array<i64: 1, 1>, scalar_prefetch = 0 : i64, scratch_operands = 0 : i64, tpu.core_type = #tpu.core_type<tc>, window_params = [{transform_indices = @transform_0, window_bounds = array<i64: 3, 40, 128>}, {transform_indices = @transform_1, window_bounds = array<i64: 128, 128>}, {transform_indices = @transform_2, window_bounds = array<i64: 128, 128>}, {pipeline_mode = #tpu.pipeline_mode<synchronous>, transform_indices = @transform_3, window_bounds = array<i64: 1, 128>}]} {
    %c0_i32 = arith.constant 0 : i32
    %0 = arith.cmpi eq, %arg0, %c0_i32 : i32
    %c0_i32_0 = arith.constant 0 : i32
    %1 = arith.cmpi eq, %arg1, %c0_i32_0 : i32
    %2 = arith.andi %0, %1 : i1
    %3 = arith.extui %2 : i1 to i32
    %c0_i32_1 = arith.constant 0 : i32
    %4 = arith.cmpi ne, %3, %c0_i32_1 : i32
    scf.if %4 {
      %cst_35 = arith.constant 0.000000e+00 : f32
      %115 = vector.broadcast %cst_35 : f32 to vector<1x128xf32>
      %c0_36 = arith.constant 0 : index
      %c0_37 = arith.constant 0 : index
      %116 = vector.load %arg5[%c0_36, %c0_37] : memref<1x128xf32, #tpu.memory_space<vmem>>, vector<1x128xf32>
      tpu.vector_store %arg5[%c0_36, %c0_37], %115 {strides = array<i32>} : memref<1x128xf32, #tpu.memory_space<vmem>>, vector<1x128xf32>,
    } else {
    }
    %c0 = arith.constant 0 : index
    %c0_2 = arith.constant 0 : index
    %c0_3 = arith.constant 0 : index
    %5 = vector.load %arg2[%c0, %c0_2, %c0_3] : memref<3x40x128xf32, #tpu.memory_space<vmem>>, vector<3x40x128xf32>
    %6 = vector.shape_cast %5 : vector<3x40x128xf32> to vector<120x128xf32>
    %c0_4 = arith.constant 0 : index
    %c0_5 = arith.constant 0 : index
    %7 = vector.load %arg3[%c0_4, %c0_5] : memref<128x128xf32, #tpu.memory_space<vmem>>, vector<128x128xf32>
    %cst = arith.constant dense<0.000000e+00> : vector<120x128xf32>
    %8 = tpu.matmul %6, %7, %cst {dimension_numbers = #tpu.dot_dimension_numbers<[1], [0], [0], [1], [0, 0, 1, 1], [], []>} : vector<120x128xf32>, vector<128x128xf32>, vector<120x128xf32> -> vector<120x128xf32>
    %c0_6 = arith.constant 0 : index
    %c0_7 = arith.constant 0 : index
    %9 = vector.load %arg4[%c0_6, %c0_7] : memref<128x128xf32, #tpu.memory_space<vmem>>, vector<128x128xf32>
    %cst_8 = arith.constant dense<0.000000e+00> : vector<120x128xf32>
    %10 = tpu.matmul %6, %9, %cst_8 {dimension_numbers = #tpu.dot_dimension_numbers<[1], [0], [0], [1], [0, 0, 1, 1], [], []>} : vector<120x128xf32>, vector<128x128xf32>, vector<120x128xf32> -> vector<120x128xf32>
    %11 = arith.mulf %8, %8 : vector<120x128xf32>
    %12 = arith.mulf %10, %10 : vector<120x128xf32>
    %13 = arith.addf %11, %12 : vector<120x128xf32>
    %14 = math.sqrt %13 : vector<120x128xf32>
    %cst_9 = arith.constant 1.000000e-07 : f32
    %15 = vector.broadcast %cst_9 : f32 to vector<120x128xf32>
    %16 = arith.addf %14, %15 : vector<120x128xf32>
    %17 = math.log %16 : vector<120x128xf32>
    %18 = vector.shape_cast %14 : vector<120x128xf32> to vector<3x40x128xf32>
    %19 = vector.shape_cast %17 : vector<120x128xf32> to vector<3x40x128xf32>
    %20 = vector.extract_strided_slice %18 {offsets = [0, 0, 0], sizes = [1, 40, 128], strides = [1, 1, 1]} : vector<3x40x128xf32> to vector<1x40x128xf32>
    %21 = vector.shape_cast %20 : vector<1x40x128xf32> to vector<40x128xf32>
    %22 = vector.extract_strided_slice %18 {offsets = [1, 0, 0], sizes = [1, 40, 128], strides = [1, 1, 1]} : vector<3x40x128xf32> to vector<1x40x128xf32>
    %23 = vector.shape_cast %22 : vector<1x40x128xf32> to vector<40x128xf32>
    %24 = vector.extract_strided_slice %18 {offsets = [2, 0, 0], sizes = [1, 40, 128], strides = [1, 1, 1]} : vector<3x40x128xf32> to vector<1x40x128xf32>
    %25 = vector.shape_cast %24 : vector<1x40x128xf32> to vector<40x128xf32>
    %26 = vector.extract_strided_slice %19 {offsets = [0, 0, 0], sizes = [1, 40, 128], strides = [1, 1, 1]} : vector<3x40x128xf32> to vector<1x40x128xf32>
    %27 = vector.shape_cast %26 : vector<1x40x128xf32> to vector<40x128xf32>
    %28 = vector.extract_strided_slice %19 {offsets = [1, 0, 0], sizes = [1, 40, 128], strides = [1, 1, 1]} : vector<3x40x128xf32> to vector<1x40x128xf32>
    %29 = vector.shape_cast %28 : vector<1x40x128xf32> to vector<40x128xf32>
    %30 = vector.extract_strided_slice %19 {offsets = [2, 0, 0], sizes = [1, 40, 128], strides = [1, 1, 1]} : vector<3x40x128xf32> to vector<1x40x128xf32>
    %31 = vector.shape_cast %30 : vector<1x40x128xf32> to vector<40x128xf32>
    %32 = arith.subf %21, %25 : vector<40x128xf32>
    %cst_10 = arith.constant 0.000000e+00 : f32
    %33 = vector.broadcast %cst_10 : f32 to vector<40x128xf32>
    %34 = arith.cmpf ogt, %32, %33 : vector<40x128xf32>
    %cst_11 = arith.constant 1.000000e+00 : f32
    %35 = vector.broadcast %cst_11 : f32 to vector<40x128xf32>
    %36 = arith.mulf %35, %32 : vector<40x128xf32>
    %cst_12 = arith.constant -1.000000e+00 : f32
    %37 = vector.broadcast %cst_12 : f32 to vector<40x128xf32>
    %38 = arith.mulf %37, %32 : vector<40x128xf32>
    %39 = arith.select %34, %36, %38 : vector<40x128xi1>, vector<40x128xf32>
    %40 = vector.shape_cast %39 : vector<40x128xf32> to vector<1x40x128xf32>
    %cst_13 = arith.constant dense<0.000000e+00> : vector<1xf32>
    %41 = vector.multi_reduction <add>, %40, %cst_13 [1, 2] : vector<1x40x128xf32> to vector<1xf32>
    %42 = vector.shape_cast %41 : vector<1xf32> to vector<1x1x1xf32>
    %43 = vector.extract %42[0, 0, 0] : f32 from vector<1x1x1xf32>
    %44 = vector.broadcast %43 : f32 to vector<1x1xf32>
    %45 = arith.subf %27, %31 : vector<40x128xf32>
    %cst_14 = arith.constant 0.000000e+00 : f32
    %46 = vector.broadcast %cst_14 : f32 to vector<40x128xf32>
    %47 = arith.cmpf ogt, %45, %46 : vector<40x128xf32>
    %cst_15 = arith.constant 1.000000e+00 : f32
    %48 = vector.broadcast %cst_15 : f32 to vector<40x128xf32>
    %49 = arith.mulf %48, %45 : vector<40x128xf32>
    %cst_16 = arith.constant -1.000000e+00 : f32
    %50 = vector.broadcast %cst_16 : f32 to vector<40x128xf32>
    %51 = arith.mulf %50, %45 : vector<40x128xf32>
    %52 = arith.select %47, %49, %51 : vector<40x128xi1>, vector<40x128xf32>
    %53 = vector.shape_cast %52 : vector<40x128xf32> to vector<1x40x128xf32>
    %cst_17 = arith.constant dense<0.000000e+00> : vector<1xf32>
    %54 = vector.multi_reduction <add>, %53, %cst_17 [1, 2] : vector<1x40x128xf32> to vector<1xf32>
    %55 = vector.shape_cast %54 : vector<1xf32> to vector<1x1x1xf32>
    %56 = vector.extract %55[0, 0, 0] : f32 from vector<1x1x1xf32>
    %57 = vector.broadcast %56 : f32 to vector<1x1xf32>
    %58 = arith.subf %23, %25 : vector<40x128xf32>
    %cst_18 = arith.constant 0.000000e+00 : f32
    %59 = vector.broadcast %cst_18 : f32 to vector<40x128xf32>
    %60 = arith.cmpf ogt, %58, %59 : vector<40x128xf32>
    %cst_19 = arith.constant 1.000000e+00 : f32
    %61 = vector.broadcast %cst_19 : f32 to vector<40x128xf32>
    %62 = arith.mulf %61, %58 : vector<40x128xf32>
    %cst_20 = arith.constant -1.000000e+00 : f32
    %63 = vector.broadcast %cst_20 : f32 to vector<40x128xf32>
    %64 = arith.mulf %63, %58 : vector<40x128xf32>
    %65 = arith.select %60, %62, %64 : vector<40x128xi1>, vector<40x128xf32>
    %66 = vector.shape_cast %65 : vector<40x128xf32> to vector<1x40x128xf32>
    %cst_21 = arith.constant dense<0.000000e+00> : vector<1xf32>
    %67 = vector.multi_reduction <add>, %66, %cst_21 [1, 2] : vector<1x40x128xf32> to vector<1xf32>
    %68 = vector.shape_cast %67 : vector<1xf32> to vector<1x1x1xf32>
    %69 = vector.extract %68[0, 0, 0] : f32 from vector<1x1x1xf32>
    %70 = vector.broadcast %69 : f32 to vector<1x1xf32>
    %71 = arith.subf %29, %31 : vector<40x128xf32>
    %cst_22 = arith.constant 0.000000e+00 : f32
    %72 = vector.broadcast %cst_22 : f32 to vector<40x128xf32>
    %73 = arith.cmpf ogt, %71, %72 : vector<40x128xf32>
    %cst_23 = arith.constant 1.000000e+00 : f32
    %74 = vector.broadcast %cst_23 : f32 to vector<40x128xf32>
    %75 = arith.mulf %74, %71 : vector<40x128xf32>
    %cst_24 = arith.constant -1.000000e+00 : f32
    %76 = vector.broadcast %cst_24 : f32 to vector<40x128xf32>
    %77 = arith.mulf %76, %71 : vector<40x128xf32>
    %78 = arith.select %73, %75, %77 : vector<40x128xi1>, vector<40x128xf32>
    %79 = vector.shape_cast %78 : vector<40x128xf32> to vector<1x40x128xf32>
    %cst_25 = arith.constant dense<0.000000e+00> : vector<1xf32>
    %80 = vector.multi_reduction <add>, %79, %cst_25 [1, 2] : vector<1x40x128xf32> to vector<1xf32>
    %81 = vector.shape_cast %80 : vector<1xf32> to vector<1x1x1xf32>
    %82 = vector.extract %81[0, 0, 0] : f32 from vector<1x1x1xf32>
    %83 = vector.broadcast %82 : f32 to vector<1x1xf32>
    %84 = tpu.iota {dimensions = array<i32: 1>} : vector<1x128xi32>
    %c0_i32_26 = arith.constant 0 : i32
    %85 = vector.broadcast %c0_i32_26 : i32 to vector<1x128xi32>
    %86 = arith.cmpi eq, %84, %85 : vector<1x128xi32>
    %cst_27 = arith.constant 0.000000e+00 : f32
    %87 = vector.shape_cast %44 : vector<1x1xf32> to vector<1x1xf32>
    %88 = vector.broadcast %87 : vector<1x1xf32> to vector<1x128xf32>
    %89 = vector.broadcast %cst_27 : f32 to vector<1x128xf32>
    %90 = arith.select %86, %88, %89 : vector<1x128xi1>, vector<1x128xf32>
    %c1_i32 = arith.constant 1 : i32
    %91 = vector.broadcast %c1_i32 : i32 to vector<1x128xi32>
    %92 = arith.cmpi eq, %84, %91 : vector<1x128xi32>
    %cst_28 = arith.constant 0.000000e+00 : f32
    %93 = vector.shape_cast %57 : vector<1x1xf32> to vector<1x1xf32>
    %94 = vector.broadcast %93 : vector<1x1xf32> to vector<1x128xf32>
    %95 = vector.broadcast %cst_28 : f32 to vector<1x128xf32>
    %96 = arith.select %92, %94, %95 : vector<1x128xi1>, vector<1x128xf32>
    %97 = arith.addf %90, %96 : vector<1x128xf32>
    %c2_i32 = arith.constant 2 : i32
    %98 = vector.broadcast %c2_i32 : i32 to vector<1x128xi32>
    %99 = arith.cmpi eq, %84, %98 : vector<1x128xi32>
    %cst_29 = arith.constant 0.000000e+00 : f32
    %100 = vector.shape_cast %70 : vector<1x1xf32> to vector<1x1xf32>
    %101 = vector.broadcast %100 : vector<1x1xf32> to vector<1x128xf32>
    %102 = vector.broadcast %cst_29 : f32 to vector<1x128xf32>
    %103 = arith.select %99, %101, %102 : vector<1x128xi1>, vector<1x128xf32>
    %104 = arith.addf %97, %103 : vector<1x128xf32>
    %c3_i32 = arith.constant 3 : i32
    %105 = vector.broadcast %c3_i32 : i32 to vector<1x128xi32>
    %106 = arith.cmpi eq, %84, %105 : vector<1x128xi32>
    %cst_30 = arith.constant 0.000000e+00 : f32
    %107 = vector.shape_cast %83 : vector<1x1xf32> to vector<1x1xf32>
    %108 = vector.broadcast %107 : vector<1x1xf32> to vector<1x128xf32>
    %109 = vector.broadcast %cst_30 : f32 to vector<1x128xf32>
    %110 = arith.select %106, %108, %109 : vector<1x128xi1>, vector<1x128xf32>
    %111 = arith.addf %104, %110 : vector<1x128xf32>
    %c0_31 = arith.constant 0 : index
    %c0_32 = arith.constant 0 : index
    %112 = vector.load %arg5[%c0_31, %c0_32] : memref<1x128xf32, #tpu.memory_space<vmem>>, vector<1x128xf32>
    %113 = arith.addf %112, %111 : vector<1x128xf32>
    %c0_33 = arith.constant 0 : index
    %c0_34 = arith.constant 0 : index
    %114 = vector.load %arg5[%c0_33, %c0_34] : memref<1x128xf32, #tpu.memory_space<vmem>>, vector<1x128xf32>
    tpu.vector_store %arg5[%c0_33, %c0_34], %113 {strides = array<i32>} : memref<1x128xf32, #tpu.memory_space<vmem>>, vector<1x128xf32>,
    return
  }
  func.func @transform_0(%arg0: i32, %arg1: i32) -> (i32, i32, i32) {
    %c0_i32 = arith.constant 0 : i32
    %c0_i32_0 = arith.constant 0 : i32
    %c0_i32_1 = arith.constant 0 : i32
    return %c0_i32, %arg0, %c0_i32_0 : i32, i32, i32
  }
  func.func @transform_1(%arg0: i32, %arg1: i32) -> (i32, i32) {
    %c0_i32 = arith.constant 0 : i32
    %c0_i32_0 = arith.constant 0 : i32
    return %c0_i32, %arg1 : i32, i32
  }
  func.func @transform_2(%arg0: i32, %arg1: i32) -> (i32, i32) {
    %c0_i32 = arith.constant 0 : i32
    %c0_i32_0 = arith.constant 0 : i32
    return %c0_i32, %arg1 : i32, i32
  }
  func.func @transform_3(%arg0: i32, %arg1: i32) -> (i32, i32) {
    %c0_i32 = arith.constant 0 : i32
    %c0_i32_0 = arith.constant 0 : i32
    %c0_i32_1 = arith.constant 0 : i32
    return %c0_i32, %c0_i32_0 : i32, i32
  }
}

</mosaic_0001>

<llo_original>
// kernel: tpu_custom_call.1
$region0: #{tpu_custom_call.1}
  #allocation0 [shape = 'u32[]', space=smem, size = 0x4, offset = 0x4, fixed_abs, tag = 'smem constant byte address 0x4 - core index']
  #allocation1 [shape = 'u32[144,128]{1,0:T(1,128)}', space=vmem, size = 0x12000, scoped, tag = 'internal scratch']
  %s0 = inlined_call_operand.hbm [shape: f32[3,40,128], index: 0, kind: input, shape index: {}]
  %s1 = inlined_call_operand.hbm [shape: f32[128,128], index: 1, kind: input, shape index: {}]
  %s2 = inlined_call_operand.hbm [shape: f32[128,128], index: 2, kind: input, shape index: {}]
  %s3 = inlined_call_operand.hbm [shape: f32[1,128], index: 3, kind: output, shape index: {}]
  %s4 = sld [smem:[#allocation0]]
  $region38: #{tpu_custom_call.1} parent=0
    _
  %s6 = ssub.s32 1, %s4
  %s7 = scalar_select 0, %s6, %s4
  $region1: #{tpu_custom_call.1} parent=0
    #allocation2 [shape = 'u8[61440]{0}', space=vmem, size = 0xf000, scoped, tag = 'input window, operand 0, single buffered']
    #allocation3 [shape = 's32[1]{0}', space=sflag, size = 0x4, scoped, tag = 'scoped memory for tpu_custom_call.1']
    #allocation4 [shape = 's32[1]{0}', space=sflag, size = 0x4, scoped, tag = 'scoped memory for tpu_custom_call.1']
    #allocation5 [shape = 'u8[65536]{0}', space=vmem, size = 0x10000, scoped, tag = 'input window, operand 1, single buffered']
    #allocation6 [shape = 's32[1]{0}', space=sflag, size = 0x4, scoped, tag = 'scoped memory for tpu_custom_call.1']
    #allocation7 [shape = 'u8[65536]{0}', space=vmem, size = 0x10000, scoped, tag = 'input window, operand 2, single buffered']
    #allocation8 [shape = 'u8[512]{0}', space=vmem, size = 0x400, scoped, tag = 'output window, operand 0, single buffered']
    %8 = vsyncpa [#allocation3], 0
    %9 = vsyncpa [#allocation6], 0
    %10 = vsyncpa [#allocation4], 0
    // Predicated region
    $region2: #{tpu_custom_call.1} parent=1 // pred_check
      _
    $region3: #{tpu_custom_call.1} parent=1 // pred_check_branch
      %12 = sbr.rel (0) target = $region5
    $region4: #{tpu_custom_call.1} parent=1 // pred_region
      %s14 = ssub.s32 1920, 1920
      %15 = vsyncadd [#allocation3], %s14
      %s16 = sshll.u32 [#allocation2], 4
      %s17 = int_to_ptr.vmem [resolvable:$true] %s16
      %22 = dma.hbm_to_vmem [thread:$0]  %s0, 1920, %s17, [#allocation3], 128, 128, 8
    $region5: #{tpu_custom_call.1} parent=1 // pred_fallthru
      _
    // Predicated region
    $region6: #{tpu_custom_call.1} parent=1 // pred_check
      _
    $region7: #{tpu_custom_call.1} parent=1 // pred_check_branch
      %24 = sbr.rel (0) target = $region9
    $region8: #{tpu_custom_call.1} parent=1 // pred_region
      %s26 = ssub.s32 2048, 2048
      %27 = vsyncadd [#allocation6], %s26
      %s28 = sshll.u32 [#allocation5], 4
      %s29 = int_to_ptr.vmem [resolvable:$true] %s28
      %34 = dma.hbm_to_vmem [thread:$0]  %s1, 2048, %s29, [#allocation6], 128, 128, 8
    $region9: #{tpu_custom_call.1} parent=1 // pred_fallthru
      _
    // Predicated region
    $region10: #{tpu_custom_call.1} parent=1 // pred_check
      _
    $region11: #{tpu_custom_call.1} parent=1 // pred_check_branch
      %36 = sbr.rel (0) target = $region13
    $region12: #{tpu_custom_call.1} parent=1 // pred_region
      %s38 = ssub.s32 2048, 2048
      %39 = vsyncadd [#allocation6], %s38
      %s40 = sshll.u32 [#allocation7], 4
      %s41 = int_to_ptr.vmem [resolvable:$true] %s40
      %46 = dma.hbm_to_vmem [thread:$0]  %s2, 2048, %s41, [#allocation6], 128, 128, 8
    $region13: #{tpu_custom_call.1} parent=1 // pred_fallthru
      _
    // Predicated region
    $region14: #{tpu_custom_call.1} parent=1 // pred_check
      _
    $region15: #{tpu_custom_call.1} parent=1 // pred_check_branch
      %48 = sbr.rel (0) target = $region17
    $region16: #{tpu_custom_call.1} parent=1 // pred_region
      %49 = dma.done [#allocation3], 1920
    $region17: #{tpu_custom_call.1} parent=1 // pred_fallthru
      _
    // Predicated region
    $region18: #{tpu_custom_call.1} parent=1 // pred_check
      _
    $region19: #{tpu_custom_call.1} parent=1 // pred_check_branch
      %51 = sbr.rel (0) target = $region21
    $region20: #{tpu_custom_call.1} parent=1 // pred_region
      %52 = dma.done [#allocation6], 2048
    $region21: #{tpu_custom_call.1} parent=1 // pred_fallthru
      _
    // Predicated region
    $region22: #{tpu_custom_call.1} parent=1 // pred_check
      _
    $region23: #{tpu_custom_call.1} parent=1 // pred_check_branch
      %54 = sbr.rel (0) target = $region25
    $region24: #{tpu_custom_call.1} parent=1 // pred_region
      %55 = dma.done [#allocation6], 2048
    $region25: #{tpu_custom_call.1} parent=1 // pred_fallthru
      _
    %p56 = scmp.eq.s32.totalorder 0, 0
    %p57 = scmp.eq.s32.totalorder 0, 0
    %p58 = pnand %p56, %p57
    %p59 = pneg %p58
    // Predicated region
    $region26: #{tpu_custom_call.1} parent=1 // pred_check
      _
    $region27: #{tpu_custom_call.1} parent=1 // pred_check_branch
      %61 = sbr.rel (%p58) target = $region29
    $region28: #{tpu_custom_call.1} parent=1 // pred_region
      %62 = vst [vmem:[#allocation8] sm:$0x1] 0.0
    $region29: #{tpu_custom_call.1} parent=1 // pred_fallthru
      _
    %v63 = vld [vmem:[#allocation2] sm:$0xff]
    %v64 = vld [vmem:[#allocation2 + $0x8] sm:$0xff]
    %v65 = vld [vmem:[#allocation2 + $0x10] sm:$0xff]
    %v66 = vld [vmem:[#allocation2 + $0x18] sm:$0xff]
    %v67 = vld [vmem:[#allocation2 + $0x20] sm:$0xff]
    %v68 = vld [vmem:[#allocation2 + $0x28] sm:$0xff]
    %v69 = vld [vmem:[#allocation2 + $0x30] sm:$0xff]
    %v70 = vld [vmem:[#allocation2 + $0x38] sm:$0xff]
    %v71 = vld [vmem:[#allocation2 + $0x40] sm:$0xff]
    %v72 = vld [vmem:[#allocation2 + $0x48] sm:$0xff]
    %v73 = vld [vmem:[#allocation2 + $0x50] sm:$0xff]
    %v74 = vld [vmem:[#allocation2 + $0x58] sm:$0xff]
    %v75 = vld [vmem:[#allocation2 + $0x60] sm:$0xff]
    %v76 = vld [vmem:[#allocation2 + $0x68] sm:$0xff]
    %v77 = vld [vmem:[#allocation2 + $0x70] sm:$0xff]
    %v78 = vld [vmem:[#allocation5] sm:$0xff]
    %v79 = vld [vmem:[#allocation5 + $0x8] sm:$0xff]
    %v80 = vld [vmem:[#allocation5 + $0x10] sm:$0xff]
    %v81 = vld [vmem:[#allocation5 + $0x18] sm:$0xff]
    %v82 = vld [vmem:[#allocation5 + $0x20] sm:$0xff]
    %v83 = vld [vmem:[#allocation5 + $0x28] sm:$0xff]
    %v84 = vld [vmem:[#allocation5 + $0x30] sm:$0xff]
    %v85 = vld [vmem:[#allocation5 + $0x38] sm:$0xff]
    %v86 = vld [vmem:[#allocation5 + $0x40] sm:$0xff]
    %v87 = vld [vmem:[#allocation5 + $0x48] sm:$0xff]
    %v88 = vld [vmem:[#allocation5 + $0x50] sm:$0xff]
    %v89 = vld [vmem:[#allocation5 + $0x58] sm:$0xff]
    %v90 = vld [vmem:[#allocation5 + $0x60] sm:$0xff]
    %v91 = vld [vmem:[#allocation5 + $0x68] sm:$0xff]
    %v92 = vld [vmem:[#allocation5 + $0x70] sm:$0xff]
    %v93 = vld [vmem:[#allocation5 + $0x78] sm:$0xff]
    %94 = vmatprep.subr.mxu0 0.0
    %95 = vmatpush1.msra.mxu0 %v93
    %96 = vmatprep.subr.mxu0 0.0
    %97 = vmatpush1.msra.mxu0 %v92
    %98 = vmatprep.subr.mxu0 0.0
    %99 = vmatpush1.msra.mxu0 %v91
    %100 = vmatprep.subr.mxu0 0.0
    %101 = vmatpush1.msra.mxu0 %v90
    %102 = vmatprep.subr.mxu0 0.0
    %103 = vmatpush1.msra.mxu0 %v89
    %104 = vmatprep.subr.mxu0 0.0
    %105 = vmatpush1.msra.mxu0 %v88
    %106 = vmatprep.subr.mxu0 0.0
    %107 = vmatpush1.msra.mxu0 %v87
    %108 = vmatprep.subr.mxu0 0.0
    %109 = vmatpush1.msra.mxu0 %v86
    %110 = vmatprep.subr.mxu0 0.0
    %111 = vmatpush1.msra.mxu0 %v85
    %112 = vmatprep.subr.mxu0 0.0
    %113 = vmatpush1.msra.mxu0 %v84
    %114 = vmatprep.subr.mxu0 0.0
    %115 = vmatpush1.msra.mxu0 %v83
    %116 = vmatprep.subr.mxu0 0.0
    %117 = vmatpush1.msra.mxu0 %v82
    %118 = vmatprep.subr.mxu0 0.0
    %119 = vmatpush1.msra.mxu0 %v81
    %120 = vmatprep.subr.mxu0 0.0
    %121 = vmatpush1.msra.mxu0 %v80
    %122 = vmatprep.subr.mxu0 0.0
    %123 = vmatpush1.msra.mxu0 %v79
    %124 = vmatprep.subr.mxu0 0.0
    %125 = vmatpush1.msra.mxu0 %v78
    %126 = vmatprep.subr.mxu0 0.0
    %127 = vmatpush2.msra.mxu0 0.0
    %128 = vmatprep.subr.mxu0 0.0
    %129 = vmatpush2.msra.mxu0 0.0
    %130 = vmatprep.subr.mxu0 0.0
    %131 = vmatpush2.msra.mxu0 0.0
    %132 = vmatprep.subr.mxu0 0.0
    %133 = vmatpush2.msra.mxu0 0.0
    %134 = vmatprep.subr.mxu0 0.0
    %135 = vmatpush2.msra.mxu0 0.0
    %136 = vmatprep.subr.mxu0 0.0
    %137 = vmatpush2.msra.mxu0 0.0
    %138 = vmatprep.subr.mxu0 0.0
    %139 = vmatpush2.msra.mxu0 0.0
    %140 = vmatprep.subr.mxu0 0.0
    %141 = vmatpush2.msra.mxu0 0.0
    %142 = vmatprep.subr.mxu0 0.0
    %143 = vmatpush2.msra.mxu0 0.0
    %144 = vmatprep.subr.mxu0 0.0
    %145 = vmatpush2.msra.mxu0 0.0
    %146 = vmatprep.subr.mxu0 0.0
    %147 = vmatpush2.msra.mxu0 0.0
    %148 = vmatprep.subr.mxu0 0.0
    %149 = vmatpush2.msra.mxu0 0.0
    %150 = vmatprep.subr.mxu0 0.0
    %151 = vmatpush2.msra.mxu0 0.0
    %152 = vmatprep.subr.mxu0 0.0
    %153 = vmatpush2.msra.mxu0 0.0
    %154 = vmatprep.subr.mxu0 0.0
    %155 = vmatpush2.msra.mxu0 0.0
    %156 = vmatprep.subr.mxu0 0.0
    %157 = vmatpush2.msra.mxu0 0.0
    %158 = vmatprep.mubr.f32.mxu0 0.0
    %159 = vmatmul.mubr.f32.gmra.mxu0 %v63
    %v160 = vpop.f32.mrf.mxu0
    %v161 = vadd.f32 0.0, %v160
    %v162 = vpop.f32.mrf.mxu0
    %163 = vmatprep.mubr.f32.mxu0 0.0
    %164 = vmatmul.mubr.f32.gmra.mxu0 %v64
    %v165 = vpop.f32.mrf.mxu0
    %v166 = vadd.f32 0.0, %v165
    %v167 = vpop.f32.mrf.mxu0
    %168 = vmatprep.mubr.f32.mxu0 0.0
    %169 = vmatmul.mubr.f32.gmra.mxu0 %v65
    %v170 = vpop.f32.mrf.mxu0
    %v171 = vadd.f32 0.0, %v170
    %v172 = vpop.f32.mrf.mxu0
    %173 = vmatprep.mubr.f32.mxu0 0.0
    %174 = vmatmul.mubr.f32.gmra.mxu0 %v66
    %v175 = vpop.f32.mrf.mxu0
    %v176 = vadd.f32 0.0, %v175
    %v177 = vpop.f32.mrf.mxu0
    %178 = vmatprep.mubr.f32.mxu0 0.0
    %179 = vmatmul.mubr.f32.gmra.mxu0 %v67
    %v180 = vpop.f32.mrf.mxu0
    %v181 = vadd.f32 0.0, %v180
    %v182 = vpop.f32.mrf.mxu0
    %183 = vmatprep.mubr.f32.mxu0 0.0
    %184 = vmatmul.mubr.f32.gmra.mxu0 %v68
    %v185 = vpop.f32.mrf.mxu0
    %v186 = vadd.f32 0.0, %v185
    %v187 = vpop.f32.mrf.mxu0
    %188 = vmatprep.mubr.f32.mxu0 0.0
    %189 = vmatmul.mubr.f32.gmra.mxu0 %v69
    %v190 = vpop.f32.mrf.mxu0
    %v191 = vadd.f32 0.0, %v190
    %v192 = vpop.f32.mrf.mxu0
    %193 = vmatprep.mubr.f32.mxu0 0.0
    %194 = vmatmul.mubr.f32.gmra.mxu0 %v70
    %v195 = vpop.f32.mrf.mxu0
    %v196 = vadd.f32 0.0, %v195
    %v197 = vpop.f32.mrf.mxu0
    %198 = vmatprep.mubr.f32.mxu0 0.0
    %199 = vmatmul.mubr.f32.gmra.mxu0 %v71
    %v200 = vpop.f32.mrf.mxu0
    %v201 = vadd.f32 0.0, %v200
    %v202 = vpop.f32.mrf.mxu0
    %203 = vmatprep.mubr.f32.mxu0 0.0
    %204 = vmatmul.mubr.f32.gmra.mxu0 %v72
    %v205 = vpop.f32.mrf.mxu0
    %v206 = vadd.f32 0.0, %v205
    %v207 = vpop.f32.mrf.mxu0
    %208 = vmatprep.mubr.f32.mxu0 0.0
    %209 = vmatmul.mubr.f32.gmra.mxu0 %v73
    %v210 = vpop.f32.mrf.mxu0
    %v211 = vadd.f32 0.0, %v210
    %v212 = vpop.f32.mrf.mxu0
    %213 = vmatprep.mubr.f32.mxu0 0.0
    %214 = vmatmul.mubr.f32.gmra.mxu0 %v74
    %v215 = vpop.f32.mrf.mxu0
    %v216 = vadd.f32 0.0, %v215
    %v217 = vpop.f32.mrf.mxu0
    %218 = vmatprep.mubr.f32.mxu0 0.0
    %219 = vmatmul.mubr.f32.gmra.mxu0 %v75
    %v220 = vpop.f32.mrf.mxu0
    %v221 = vadd.f32 0.0, %v220
    %v222 = vpop.f32.mrf.mxu0
    %223 = vmatprep.mubr.f32.mxu0 0.0
    %224 = vmatmul.mubr.f32.gmra.mxu0 %v76
    %v225 = vpop.f32.mrf.mxu0
    %v226 = vadd.f32 0.0, %v225
    %v227 = vpop.f32.mrf.mxu0
    %228 = vmatprep.mubr.f32.mxu0 0.0
    %229 = vmatmul.mubr.f32.gmra.mxu0 %v77
    %v230 = vpop.f32.mrf.mxu0
    %v231 = vadd.f32 0.0, %v230
    %v232 = vpop.f32.mrf.mxu0
    %233 = vdwg.mxu0
    %v234 = vld [vmem:[#allocation7] sm:$0xff]
    %v235 = vld [vmem:[#allocation7 + $0x8] sm:$0xff]
    %v236 = vld [vmem:[#allocation7 + $0x10] sm:$0xff]
    %v237 = vld [vmem:[#allocation7 + $0x18] sm:$0xff]
    %v238 = vld [vmem:[#allocation7 + $0x20] sm:$0xff]
    %v239 = vld [vmem:[#allocation7 + $0x28] sm:$0xff]
    %v240 = vld [vmem:[#allocation7 + $0x30] sm:$0xff]
    %v241 = vld [vmem:[#allocation7 + $0x38] sm:$0xff]
    %v242 = vld [vmem:[#allocation7 + $0x40] sm:$0xff]
    %v243 = vld [vmem:[#allocation7 + $0x48] sm:$0xff]
    %v244 = vld [vmem:[#allocation7 + $0x50] sm:$0xff]
    %v245 = vld [vmem:[#allocation7 + $0x58] sm:$0xff]
    %v246 = vld [vmem:[#allocation7 + $0x60] sm:$0xff]
    %v247 = vld [vmem:[#allocation7 + $0x68] sm:$0xff]
    %v248 = vld [vmem:[#allocation7 + $0x70] sm:$0xff]
    %v249 = vld [vmem:[#allocation7 + $0x78] sm:$0xff]
    %250 = vmatprep.subr.mxu0 0.0
    %251 = vmatpush1.msra.mxu0 %v249
    %252 = vmatprep.subr.mxu0 0.0
    %253 = vmatpush1.msra.mxu0 %v248
    %254 = vmatprep.subr.mxu0 0.0
    %255 = vmatpush1.msra.mxu0 %v247
    %256 = vmatprep.subr.mxu0 0.0
    %257 = vmatpush1.msra.mxu0 %v246
    %258 = vmatprep.subr.mxu0 0.0
    %259 = vmatpush1.msra.mxu0 %v245
    %260 = vmatprep.subr.mxu0 0.0
    %261 = vmatpush1.msra.mxu0 %v244
    %262 = vmatprep.subr.mxu0 0.0
    %263 = vmatpush1.msra.mxu0 %v243
    %264 = vmatprep.subr.mxu0 0.0
    %265 = vmatpush1.msra.mxu0 %v242
    %266 = vmatprep.subr.mxu0 0.0
    %267 = vmatpush1.msra.mxu0 %v241
    %268 = vmatprep.subr.mxu0 0.0
    %269 = vmatpush1.msra.mxu0 %v240
    %270 = vmatprep.subr.mxu0 0.0
    %271 = vmatpush1.msra.mxu0 %v239
    %272 = vmatprep.subr.mxu0 0.0
    %273 = vmatpush1.msra.mxu0 %v238
    %274 = vmatprep.subr.mxu0 0.0
    %275 = vmatpush1.msra.mxu0 %v237
    %276 = vmatprep.subr.mxu0 0.0
    %277 = vmatpush1.msra.mxu0 %v236
    %278 = vmatprep.subr.mxu0 0.0
    %279 = vmatpush1.msra.mxu0 %v235
    %280 = vmatprep.subr.mxu0 0.0
    %281 = vmatpush1.msra.mxu0 %v234
    %282 = vmatprep.subr.mxu0 0.0
    %283 = vmatpush2.msra.mxu0 0.0
    %284 = vmatprep.subr.mxu0 0.0
    %285 = vmatpush2.msra.mxu0 0.0
    %286 = vmatprep.subr.mxu0 0.0
    %287 = vmatpush2.msra.mxu0 0.0
    %288 = vmatprep.subr.mxu0 0.0
    %289 = vmatpush2.msra.mxu0 0.0
    %290 = vmatprep.subr.mxu0 0.0
    %291 = vmatpush2.msra.mxu0 0.0
    %292 = vmatprep.subr.mxu0 0.0
    %293 = vmatpush2.msra.mxu0 0.0
    %294 = vmatprep.subr.mxu0 0.0
    %295 = vmatpush2.msra.mxu0 0.0
    %296 = vmatprep.subr.mxu0 0.0
    %297 = vmatpush2.msra.mxu0 0.0
    %298 = vmatprep.subr.mxu0 0.0
    %299 = vmatpush2.msra.mxu0 0.0
    %300 = vmatprep.subr.mxu0 0.0
    %301 = vmatpush2.msra.mxu0 0.0
    %302 = vmatprep.subr.mxu0 0.0
    %303 = vmatpush2.msra.mxu0 0.0
    %304 = vmatprep.subr.mxu0 0.0
    %305 = vmatpush2.msra.mxu0 0.0
    %306 = vmatprep.subr.mxu0 0.0
    %307 = vmatpush2.msra.mxu0 0.0
    %308 = vmatprep.subr.mxu0 0.0
    %309 = vmatpush2.msra.mxu0 0.0
    %310 = vmatprep.subr.mxu0 0.0
    %311 = vmatpush2.msra.mxu0 0.0
    %312 = vmatprep.subr.mxu0 0.0
    %313 = vmatpush2.msra.mxu0 0.0
    %314 = vmatprep.mubr.f32.mxu0 0.0
    %315 = vmatmul.mubr.f32.gmra.mxu0 %v63
    %v316 = vpop.f32.mrf.mxu0
    %v317 = vadd.f32 0.0, %v316
    %v318 = vpop.f32.mrf.mxu0
    %319 = vmatprep.mubr.f32.mxu0 0.0
    %320 = vmatmul.mubr.f32.gmra.mxu0 %v64
    %v321 = vpop.f32.mrf.mxu0
    %v322 = vadd.f32 0.0, %v321
    %v323 = vpop.f32.mrf.mxu0
    %324 = vmatprep.mubr.f32.mxu0 0.0
    %325 = vmatmul.mubr.f32.gmra.mxu0 %v65
    %v326 = vpop.f32.mrf.mxu0
    %v327 = vadd.f32 0.0, %v326
    %v328 = vpop.f32.mrf.mxu0
    %329 = vmatprep.mubr.f32.mxu0 0.0
    %330 = vmatmul.mubr.f32.gmra.mxu0 %v66
    %v331 = vpop.f32.mrf.mxu0
    %v332 = vadd.f32 0.0, %v331
    %v333 = vpop.f32.mrf.mxu0
    %334 = vmatprep.mubr.f32.mxu0 0.0
    %335 = vmatmul.mubr.f32.gmra.mxu0 %v67
    %v336 = vpop.f32.mrf.mxu0
    %v337 = vadd.f32 0.0, %v336
    %v338 = vpop.f32.mrf.mxu0
    %339 = vmatprep.mubr.f32.mxu0 0.0
    %340 = vmatmul.mubr.f32.gmra.mxu0 %v68
    %v341 = vpop.f32.mrf.mxu0
    %v342 = vadd.f32 0.0, %v341
    %v343 = vpop.f32.mrf.mxu0
    %344 = vmatprep.mubr.f32.mxu0 0.0
    %345 = vmatmul.mubr.f32.gmra.mxu0 %v69
    %v346 = vpop.f32.mrf.mxu0
    %v347 = vadd.f32 0.0, %v346
    %v348 = vpop.f32.mrf.mxu0
    %349 = vmatprep.mubr.f32.mxu0 0.0
    %350 = vmatmul.mubr.f32.gmra.mxu0 %v70
    %v351 = vpop.f32.mrf.mxu0
    %v352 = vadd.f32 0.0, %v351
    %v353 = vpop.f32.mrf.mxu0
    %354 = vmatprep.mubr.f32.mxu0 0.0
    %355 = vmatmul.mubr.f32.gmra.mxu0 %v71
    %v356 = vpop.f32.mrf.mxu0
    %v357 = vadd.f32 0.0, %v356
    %v358 = vpop.f32.mrf.mxu0
    %359 = vmatprep.mubr.f32.mxu0 0.0
    %360 = vmatmul.mubr.f32.gmra.mxu0 %v72
    %v361 = vpop.f32.mrf.mxu0
    %v362 = vadd.f32 0.0, %v361
    %v363 = vpop.f32.mrf.mxu0
    %364 = vmatprep.mubr.f32.mxu0 0.0
    %365 = vmatmul.mubr.f32.gmra.mxu0 %v73
    %v366 = vpop.f32.mrf.mxu0
    %v367 = vadd.f32 0.0, %v366
    %v368 = vpop.f32.mrf.mxu0
    %369 = vmatprep.mubr.f32.mxu0 0.0
    %370 = vmatmul.mubr.f32.gmra.mxu0 %v74
    %v371 = vpop.f32.mrf.mxu0
    %v372 = vadd.f32 0.0, %v371
    %v373 = vpop.f32.mrf.mxu0
    %374 = vmatprep.mubr.f32.mxu0 0.0
    %375 = vmatmul.mubr.f32.gmra.mxu0 %v75
    %v376 = vpop.f32.mrf.mxu0
    %v377 = vadd.f32 0.0, %v376
    %v378 = vpop.f32.mrf.mxu0
    %379 = vmatprep.mubr.f32.mxu0 0.0
    %380 = vmatmul.mubr.f32.gmra.mxu0 %v76
    %v381 = vpop.f32.mrf.mxu0
    %v382 = vadd.f32 0.0, %v381
    %v383 = vpop.f32.mrf.mxu0
    %384 = vmatprep.mubr.f32.mxu0 0.0
    %385 = vmatmul.mubr.f32.gmra.mxu0 %v77
    %v386 = vpop.f32.mrf.mxu0
    %v387 = vadd.f32 0.0, %v386
    %v388 = vpop.f32.mrf.mxu0
    %389 = vdwg.mxu0
    %v390 = vmul.f32 %v161, %v161
    %v391 = vmul.f32 %v166, %v166
    %v392 = vmul.f32 %v171, %v171
    %v393 = vmul.f32 %v176, %v176
    %v394 = vmul.f32 %v181, %v181
    %v395 = vmul.f32 %v186, %v186
    %v396 = vmul.f32 %v191, %v191
    %v397 = vmul.f32 %v196, %v196
    %v398 = vmul.f32 %v201, %v201
    %v399 = vmul.f32 %v206, %v206
    %v400 = vmul.f32 %v211, %v211
    %v401 = vmul.f32 %v216, %v216
    %v402 = vmul.f32 %v221, %v221
    %v403 = vmul.f32 %v226, %v226
    %v404 = vmul.f32 %v231, %v231
    %v405 = vmul.f32 %v317, %v317
    %v406 = vmul.f32 %v322, %v322
    %v407 = vmul.f32 %v327, %v327
    %v408 = vmul.f32 %v332, %v332
    %v409 = vmul.f32 %v337, %v337
    %v410 = vmul.f32 %v342, %v342
    %v411 = vmul.f32 %v347, %v347
    %v412 = vmul.f32 %v352, %v352
    %v413 = vmul.f32 %v357, %v357
    %v414 = vmul.f32 %v362, %v362
    %v415 = vmul.f32 %v367, %v367
    %v416 = vmul.f32 %v372, %v372
    %v417 = vmul.f32 %v377, %v377
    %v418 = vmul.f32 %v382, %v382
    %v419 = vmul.f32 %v387, %v387
    %v420 = vadd.f32 %v390, %v405
    %v421 = vadd.f32 %v391, %v406
    %v422 = vadd.f32 %v392, %v407
    %v423 = vadd.f32 %v393, %v408
    %v424 = vadd.f32 %v394, %v409
    %v425 = vadd.f32 %v395, %v410
    %v426 = vadd.f32 %v396, %v411
    %v427 = vadd.f32 %v397, %v412
    %v428 = vadd.f32 %v398, %v413
    %v429 = vadd.f32 %v399, %v414
    %v430 = vadd.f32 %v400, %v415
    %v431 = vadd.f32 %v401, %v416
    %v432 = vadd.f32 %v402, %v417
    %v433 = vadd.f32 %v403, %v418
    %v434 = vadd.f32 %v404, %v419
    %v435 = vrsqrt.pop %v420
    %v436 = vmul.f32 %v420, %v435
    %vm437 = vcmp.eq.f32.partialorder %v420, inf
    %v438 = vsel %vm437, %v420, %v436
    %vm439 = vcmp.eq.f32.partialorder %v420, 0.0
    %v440 = vand.u32 %v420, 2147483648
    %v441 = vsel %vm439, %v440, %v438
    %v442 = vrsqrt.pop %v421
    %v443 = vmul.f32 %v421, %v442
    %vm444 = vcmp.eq.f32.partialorder %v421, inf
    %v445 = vsel %vm444, %v421, %v443
    %vm446 = vcmp.eq.f32.partialorder %v421, 0.0
    %v447 = vand.u32 %v421, 2147483648
    %v448 = vsel %vm446, %v447, %v445
    %v449 = vrsqrt.pop %v422
    %v450 = vmul.f32 %v422, %v449
    %vm451 = vcmp.eq.f32.partialorder %v422, inf
    %v452 = vsel %vm451, %v422, %v450
    %vm453 = vcmp.eq.f32.partialorder %v422, 0.0
    %v454 = vand.u32 %v422, 2147483648
    %v455 = vsel %vm453, %v454, %v452
    %v456 = vrsqrt.pop %v423
    %v457 = vmul.f32 %v423, %v456
    %vm458 = vcmp.eq.f32.partialorder %v423, inf
    %v459 = vsel %vm458, %v423, %v457
    %vm460 = vcmp.eq.f32.partialorder %v423, 0.0
    %v461 = vand.u32 %v423, 2147483648
    %v462 = vsel %vm460, %v461, %v459
    %v463 = vrsqrt.pop %v424
    %v464 = vmul.f32 %v424, %v463
    %vm465 = vcmp.eq.f32.partialorder %v424, inf
    %v466 = vsel %vm465, %v424, %v464
    %vm467 = vcmp.eq.f32.partialorder %v424, 0.0
    %v468 = vand.u32 %v424, 2147483648
    %v469 = vsel %vm467, %v468, %v466
    %v470 = vrsqrt.pop %v425
    %v471 = vmul.f32 %v425, %v470
    %vm472 = vcmp.eq.f32.partialorder %v425, inf
    %v473 = vsel %vm472, %v425, %v471
    %vm474 = vcmp.eq.f32.partialorder %v425, 0.0
    %v475 = vand.u32 %v425, 2147483648
    %v476 = vsel %vm474, %v475, %v473
    %v477 = vrsqrt.pop %v426
    %v478 = vmul.f32 %v426, %v477
    %vm479 = vcmp.eq.f32.partialorder %v426, inf
    %v480 = vsel %vm479, %v426, %v478
    %vm481 = vcmp.eq.f32.partialorder %v426, 0.0
    %v482 = vand.u32 %v426, 2147483648
    %v483 = vsel %vm481, %v482, %v480
    %v484 = vrsqrt.pop %v427
    %v485 = vmul.f32 %v427, %v484
    %vm486 = vcmp.eq.f32.partialorder %v427, inf
    %v487 = vsel %vm486, %v427, %v485
    %vm488 = vcmp.eq.f32.partialorder %v427, 0.0
    %v489 = vand.u32 %v427, 2147483648
    %v490 = vsel %vm488, %v489, %v487
    %v491 = vrsqrt.pop %v428
    %v492 = vmul.f32 %v428, %v491
    %vm493 = vcmp.eq.f32.partialorder %v428, inf
    %v494 = vsel %vm493, %v428, %v492
    %vm495 = vcmp.eq.f32.partialorder %v428, 0.0
    %v496 = vand.u32 %v428, 2147483648
    %v497 = vsel %vm495, %v496, %v494
    %v498 = vrsqrt.pop %v429
    %v499 = vmul.f32 %v429, %v498
    %vm500 = vcmp.eq.f32.partialorder %v429, inf
    %v501 = vsel %vm500, %v429, %v499
    %vm502 = vcmp.eq.f32.partialorder %v429, 0.0
    %v503 = vand.u32 %v429, 2147483648
    %v504 = vsel %vm502, %v503, %v501
    %v505 = vrsqrt.pop %v430
    %v506 = vmul.f32 %v430, %v505
    %vm507 = vcmp.eq.f32.partialorder %v430, inf
    %v508 = vsel %vm507, %v430, %v506
    %vm509 = vcmp.eq.f32.partialorder %v430, 0.0
    %v510 = vand.u32 %v430, 2147483648
    %v511 = vsel %vm509, %v510, %v508
    %v512 = vrsqrt.pop %v431
    %v513 = vmul.f32 %v431, %v512
    %vm514 = vcmp.eq.f32.partialorder %v431, inf
    %v515 = vsel %vm514, %v431, %v513
    %vm516 = vcmp.eq.f32.partialorder %v431, 0.0
    %v517 = vand.u32 %v431, 2147483648
    %v518 = vsel %vm516, %v517, %v515
    %v519 = vrsqrt.pop %v432
    %v520 = vmul.f32 %v432, %v519
    %vm521 = vcmp.eq.f32.partialorder %v432, inf
    %v522 = vsel %vm521, %v432, %v520
    %vm523 = vcmp.eq.f32.partialorder %v432, 0.0
    %v524 = vand.u32 %v432, 2147483648
    %v525 = vsel %vm523, %v524, %v522
    %v526 = vrsqrt.pop %v433
    %v527 = vmul.f32 %v433, %v526
    %vm528 = vcmp.eq.f32.partialorder %v433, inf
    %v529 = vsel %vm528, %v433, %v527
    %vm530 = vcmp.eq.f32.partialorder %v433, 0.0
    %v531 = vand.u32 %v433, 2147483648
    %v532 = vsel %vm530, %v531, %v529
    %v533 = vrsqrt.pop %v434
    %v534 = vmul.f32 %v434, %v533
    %vm535 = vcmp.eq.f32.partialorder %v434, inf
    %v536 = vsel %vm535, %v434, %v534
    %vm537 = vcmp.eq.f32.partialorder %v434, 0.0
    %v538 = vand.u32 %v434, 2147483648
    %v539 = vsel %vm537, %v538, %v536
    %v540 = vadd.f32 %v441, 1e-07
    %v541 = vadd.f32 %v448, 1e-07
    %v542 = vadd.f32 %v455, 1e-07
    %v543 = vadd.f32 %v462, 1e-07
    %v544 = vadd.f32 %v469, 1e-07
    %v545 = vadd.f32 %v476, 1e-07
    %v546 = vadd.f32 %v483, 1e-07
    %v547 = vadd.f32 %v490, 1e-07
    %v548 = vadd.f32 %v497, 1e-07
    %v549 = vadd.f32 %v504, 1e-07
    %v550 = vadd.f32 %v511, 1e-07
    %v551 = vadd.f32 %v518, 1e-07
    %v552 = vadd.f32 %v525, 1e-07
    %v553 = vadd.f32 %v532, 1e-07
    %v554 = vadd.f32 %v539, 1e-07
    %v555 = vlog2.pop %v540
    %v556 = vmul.f32 %v555, 0.6931472
    %v557 = vlog2.pop %v541
    %v558 = vmul.f32 %v557, 0.6931472
    %v559 = vlog2.pop %v542
    %v560 = vmul.f32 %v559, 0.6931472
    %v561 = vlog2.pop %v543
    %v562 = vmul.f32 %v561, 0.6931472
    %v563 = vlog2.pop %v544
    %v564 = vmul.f32 %v563, 0.6931472
    %v565 = vlog2.pop %v545
    %v566 = vmul.f32 %v565, 0.6931472
    %v567 = vlog2.pop %v546
    %v568 = vmul.f32 %v567, 0.6931472
    %v569 = vlog2.pop %v547
    %v570 = vmul.f32 %v569, 0.6931472
    %v571 = vlog2.pop %v548
    %v572 = vmul.f32 %v571, 0.6931472
    %v573 = vlog2.pop %v549
    %v574 = vmul.f32 %v573, 0.6931472
    %v575 = vlog2.pop %v550
    %v576 = vmul.f32 %v575, 0.6931472
    %v577 = vlog2.pop %v551
    %v578 = vmul.f32 %v577, 0.6931472
    %v579 = vlog2.pop %v552
    %v580 = vmul.f32 %v579, 0.6931472
    %v581 = vlog2.pop %v553
    %v582 = vmul.f32 %v581, 0.6931472
    %v583 = vlog2.pop %v554
    %v584 = vmul.f32 %v583, 0.6931472
    %v585 = vsub.f32 %v441, %v511
    %v586 = vsub.f32 %v448, %v518
    %v587 = vsub.f32 %v455, %v525
    %v588 = vsub.f32 %v462, %v532
    %v589 = vsub.f32 %v469, %v539
    %vm590 = vcmp.gt.f32.partialorder %v585, 0.0
    %vm591 = vcmp.gt.f32.partialorder %v586, 0.0
    %vm592 = vcmp.gt.f32.partialorder %v587, 0.0
    %vm593 = vcmp.gt.f32.partialorder %v588, 0.0
    %vm594 = vcmp.gt.f32.partialorder %v589, 0.0
    %v595 = vmul.f32 %v585, -1.0
    %v596 = vmul.f32 %v586, -1.0
    %v597 = vmul.f32 %v587, -1.0
    %v598 = vmul.f32 %v588, -1.0
    %v599 = vmul.f32 %v589, -1.0
    %v600 = vsel %vm590, %v585, %v595
    %v601 = vsel %vm591, %v586, %v596
    %v602 = vsel %vm592, %v587, %v597
    %v603 = vsel %vm593, %v588, %v598
    %v604 = vsel %vm594, %v589, %v599
    %v605 = vadd.f32 %v600, %v601
    %v606 = vadd.f32 %v605, %v602
    %v607 = vadd.f32 %v606, %v603
    %v608 = vadd.f32 %v607, %v604
    %609 = vadd.xlane.f32.xlu0 %v608
    %v610 = vpop.xlane.xlu0 %609
    %v611 = vrot.slane %v610, 4
    %v612 = vadd.f32 %v610, %v611
    %v613 = vrot.slane %v612, 2
    %v614 = vadd.f32 %v612, %v613
    %v615 = vrot.slane %v614, 1
    %v616 = vadd.f32 %v614, %v615
    %s617 = vtos %v616
    %v618 = vsub.f32 %v556, %v576
    %v619 = vsub.f32 %v558, %v578
    %v620 = vsub.f32 %v560, %v580
    %v621 = vsub.f32 %v562, %v582
    %v622 = vsub.f32 %v564, %v584
    %vm623 = vcmp.gt.f32.partialorder %v618, 0.0
    %vm624 = vcmp.gt.f32.partialorder %v619, 0.0
    %vm625 = vcmp.gt.f32.partialorder %v620, 0.0
    %vm626 = vcmp.gt.f32.partialorder %v621, 0.0
    %vm627 = vcmp.gt.f32.partialorder %v622, 0.0
    %v628 = vmul.f32 %v618, -1.0
    %v629 = vmul.f32 %v619, -1.0
    %v630 = vmul.f32 %v620, -1.0
    %v631 = vmul.f32 %v621, -1.0
    %v632 = vmul.f32 %v622, -1.0
    %v633 = vsel %vm623, %v618, %v628
    %v634 = vsel %vm624, %v619, %v629
    %v635 = vsel %vm625, %v620, %v630
    %v636 = vsel %vm626, %v621, %v631
    %v637 = vsel %vm627, %v622, %v632
    %v638 = vadd.f32 %v633, %v634
    %v639 = vadd.f32 %v638, %v635
    %v640 = vadd.f32 %v639, %v636
    %v641 = vadd.f32 %v640, %v637
    %642 = vadd.xlane.f32.xlu0 %v641
    %v643 = vpop.xlane.xlu0 %642
    %v644 = vrot.slane %v643, 4
    %v645 = vadd.f32 %v643, %v644
    %v646 = vrot.slane %v645, 2
    %v647 = vadd.f32 %v645, %v646
    %v648 = vrot.slane %v647, 1
    %v649 = vadd.f32 %v647, %v648
    %s650 = vtos %v649
    %v651 = vsub.f32 %v476, %v511
    %v652 = vsub.f32 %v483, %v518
    %v653 = vsub.f32 %v490, %v525
    %v654 = vsub.f32 %v497, %v532
    %v655 = vsub.f32 %v504, %v539
    %vm656 = vcmp.gt.f32.partialorder %v651, 0.0
    %vm657 = vcmp.gt.f32.partialorder %v652, 0.0
    %vm658 = vcmp.gt.f32.partialorder %v653, 0.0
    %vm659 = vcmp.gt.f32.partialorder %v654, 0.0
    %vm660 = vcmp.gt.f32.partialorder %v655, 0.0
    %v661 = vmul.f32 %v651, -1.0
    %v662 = vmul.f32 %v652, -1.0
    %v663 = vmul.f32 %v653, -1.0
    %v664 = vmul.f32 %v654, -1.0
    %v665 = vmul.f32 %v655, -1.0
    %v666 = vsel %vm656, %v651, %v661
    %v667 = vsel %vm657, %v652, %v662
    %v668 = vsel %vm658, %v653, %v663
    %v669 = vsel %vm659, %v654, %v664
    %v670 = vsel %vm660, %v655, %v665
    %v671 = vadd.f32 %v666, %v667
    %v672 = vadd.f32 %v671, %v668
    %v673 = vadd.f32 %v672, %v669
    %v674 = vadd.f32 %v673, %v670
    %675 = vadd.xlane.f32.xlu0 %v674
    %v676 = vpop.xlane.xlu0 %675
    %v677 = vrot.slane %v676, 4
    %v678 = vadd.f32 %v676, %v677
    %v679 = vrot.slane %v678, 2
    %v680 = vadd.f32 %v678, %v679
    %v681 = vrot.slane %v680, 1
    %v682 = vadd.f32 %v680, %v681
    %s683 = vtos %v682
    %v684 = vsub.f32 %v566, %v576
    %v685 = vsub.f32 %v568, %v578
    %v686 = vsub.f32 %v570, %v580
    %v687 = vsub.f32 %v572, %v582
    %v688 = vsub.f32 %v574, %v584
    %vm689 = vcmp.gt.f32.partialorder %v684, 0.0
    %vm690 = vcmp.gt.f32.partialorder %v685, 0.0
    %vm691 = vcmp.gt.f32.partialorder %v686, 0.0
    %vm692 = vcmp.gt.f32.partialorder %v687, 0.0
    %vm693 = vcmp.gt.f32.partialorder %v688, 0.0
    %v694 = vmul.f32 %v684, -1.0
    %v695 = vmul.f32 %v685, -1.0
    %v696 = vmul.f32 %v686, -1.0
    %v697 = vmul.f32 %v687, -1.0
    %v698 = vmul.f32 %v688, -1.0
    %v699 = vsel %vm689, %v684, %v694
    %v700 = vsel %vm690, %v685, %v695
    %v701 = vsel %vm691, %v686, %v696
    %v702 = vsel %vm692, %v687, %v697
    %v703 = vsel %vm693, %v688, %v698
    %v704 = vadd.f32 %v699, %v700
    %v705 = vadd.f32 %v704, %v701
    %v706 = vadd.f32 %v705, %v702
    %v707 = vadd.f32 %v706, %v703
    %708 = vadd.xlane.f32.xlu0 %v707
    %v709 = vpop.xlane.xlu0 %708
    %v710 = vrot.slane %v709, 4
    %v711 = vadd.f32 %v709, %v710
    %v712 = vrot.slane %v711, 2
    %v713 = vadd.f32 %v711, %v712
    %v714 = vrot.slane %v713, 1
    %v715 = vadd.f32 %v713, %v714
    %s716 = vtos %v715
    %v717 = vlaneseq
    %v718 = vand.u32 %v717, 127
    %vm719 = vcmp.eq.s32.totalorder %v718, 0
    %v720 = vstv %s617
    %v721 = vsel %vm719, %v720, 0.0
    %vm722 = vcmp.eq.s32.totalorder %v718, 1
    %v723 = vstv %s650
    %v724 = vsel %vm722, %v723, 0.0
    %v725 = vadd.f32 %v721, %v724
    %vm726 = vcmp.eq.s32.totalorder %v718, 2
    %v727 = vstv %s683
    %v728 = vsel %vm726, %v727, 0.0
    %v729 = vadd.f32 %v725, %v728
    %vm730 = vcmp.eq.s32.totalorder %v718, 3
    %v731 = vstv %s716
    %v732 = vsel %vm730, %v731, 0.0
    %v733 = vadd.f32 %v729, %v732
    %v734 = vld [vmem:[#allocation8] sm:$0x1]
    %v735 = vadd.f32 %v734, %v733
    %736 = vst [vmem:[#allocation8] sm:$0x1] %v735
    // Predicated region
    $region30: #{tpu_custom_call.1} parent=1 // pred_check
      _
    $region31: #{tpu_custom_call.1} parent=1 // pred_check_branch
      %738 = sbr.rel (0) target = $region33
    $region32: #{tpu_custom_call.1} parent=1 // pred_region
      %s740 = ssub.s32 16, 16
      %741 = vsyncadd [#allocation4], %s740
      %s743 = sshll.u32 [#allocation8], 4
      %s744 = int_to_ptr.vmem [resolvable:$true] %s743
      %746 = dma.vmem_to_hbm [thread:$0]  %s744, 16, %s3, [#allocation4]
    $region33: #{tpu_custom_call.1} parent=1 // pred_fallthru
      _
    // Predicated region
    $region34: #{tpu_custom_call.1} parent=1 // pred_check
      _
    $region35: #{tpu_custom_call.1} parent=1 // pred_check_branch
      %748 = sbr.rel (0) target = $region37
    $region36: #{tpu_custom_call.1} parent=1 // pred_region
      %749 = dma.done [#allocation4], 16
    $region37: #{tpu_custom_call.1} parent=1 // pred_fallthru
      _
    %750 = vsyncpa [#allocation3], 1
    %751 = vsyncpa [#allocation6], 1
    %752 = vsyncpa [#allocation4], 1

</llo_original>
